<compile_context>
chip_gen: v7x
topology: tpu7x:2x2x1
jax: 0.10.0
libtpu: 0.0.40
codegen_flags: <defaults>
</compile_context>

<pallas_src>
import math

import jax
import jax.numpy as jnp
import numpy as np
from jax import lax
from jax.experimental import pallas as pl
from jax.experimental.pallas import tpu as pltpu

_VMEM_LIMIT = 32 * 1024 * 1024    # explicit scoped-VMEM limit (v5e default is only ~16 MiB)
_BLOCK_BUDGET = 8 * 1024 * 1024   # per-grid-step VMEM budget used to size the batch*channel block


# ---------------------------------------------------------------------------
# Host-side interpolation weight matrices (exact PyTorch semantics, float64).
# ---------------------------------------------------------------------------
def _resize_weight_matrix(in_size, out_size, method):
    """Returns a [out_size, in_size] resampling matrix."""
    if in_size == out_size:
        return np.eye(out_size, dtype=np.float64)
    if method == 'bilinear':
        # PyTorch align_corners=False: src = (dst + 0.5) * (in/out) - 0.5, clamped.
        scale = in_size / out_size
        dst = np.arange(out_size, dtype=np.float64)
        src = np.maximum((dst + 0.5) * scale - 0.5, 0.0)
        i0 = np.minimum(np.floor(src).astype(np.int64), in_size - 1)
        i1 = np.minimum(i0 + 1, in_size - 1)
        frac = src - np.floor(src)
        w = np.zeros((out_size, in_size), dtype=np.float64)
        w[np.arange(out_size), i0] += 1.0 - frac
        w[np.arange(out_size), i1] += frac
        return w
    if method == 'nearest':
        # PyTorch legacy 'nearest' (floor(dst*scale)), not 'nearest-exact'.
        scale = in_size / out_size
        dst = np.arange(out_size, dtype=np.float64)
        idx = np.minimum(np.floor(dst * scale).astype(np.int64), in_size - 1)
        w = np.zeros((out_size, in_size), dtype=np.float64)
        w[np.arange(out_size), idx] = 1.0
        return w
    # TODO(synk): 'linear' / 'trilinear' / 'bicubic' / 'area' modes not implemented in the Pallas port.
    raise NotImplementedError(f"method={method!r} not implemented in the Pallas port")


def _compose_stage_weights(size, n_stages, multiplier, method):
    """Compose all n_stages resampling matrices into one (resampling is linear -> exact)."""
    w = np.eye(size, dtype=np.float64)
    cur = size
    for _ in range(n_stages):
        nxt = int(math.floor(cur * multiplier))
        assert nxt > 0, "multiplier too small for this input size"
        w = _resize_weight_matrix(cur, nxt, method) @ w
        cur = nxt
    return w.astype(np.float32), cur


# ---------------------------------------------------------------------------
# Block-size selection for the flattened batch*channel axis.
# ---------------------------------------------------------------------------
def _pick_bc_block(bc, h_in, w_in, h_out, w_out, itemsize, budget=_BLOCK_BUDGET):
    """Largest divisor of `bc` whose per-step VMEM footprint (lane-padded, double-buffered)
    stays under `budget` while keeping the blocked sublane dims 8/16-aligned."""
    def padded(rows, cols):  # VMEM bytes with lane padding to 128
        return rows * (-(-cols // 128) * 128) * itemsize

    per_image = (2 * padded(h_in, w_in)        # x block (double buffered)
                 + padded(h_in, w_out)         # intermediate scratch
                 + 2 * padded(h_out, w_out))   # output block (double buffered)
    blk = int(max(1, min(bc, budget // max(per_image, 1))))
    sub = 8 if itemsize >= 4 else (16 if itemsize == 2 else 32)
    for b in range(blk, 0, -1):
        if bc % b:
            continue
        if b == bc or ((b * h_in) % sub == 0 and (b * h_out) % sub == 0):
            return b
    # Fallback: whole batch*channel axis as one block (block dims == full array dims, always legal).
    return bc


# ---------------------------------------------------------------------------
# Resize kernel: BLK images per grid step, tall column matmul + per-image row matmuls.
# ---------------------------------------------------------------------------
def _make_resize_kernel(blk, h_in, h_out):
    def kernel(wh_ref, wwt_ref, x_ref, o_ref, t_ref):
        # wh_ref : [h_out, H]      row-resampling weights   (VMEM-resident)
        # wwt_ref: [W, w_out]      column weights, pre-transposed (VMEM-resident)
        # x_ref  : [blk*H, W]      blk flattened images
        # o_ref  : [blk*h_out, w_out]
        # t_ref  : [blk*H, w_out]  VMEM scratch (intermediate)
        # Column resample for the whole block as ONE tall MXU matmul (M = blk*H rows).
        t_ref[...] = jnp.dot(x_ref[...], wwt_ref[...],
                             preferred_element_type=jnp.float32).astype(t_ref.dtype)

        # Row resample per image; data stays VMEM-resident, no HBM traffic.
        def body(k, carry):
            r0 = pl.multiple_of(k * h_in, h_in)
            o0 = pl.multiple_of(k * h_out, h_out)
            tk = t_ref[pl.ds(r0, h_in), :]                                  # [H, w_out]
            ok = jnp.dot(wh_ref[...], tk, preferred_element_type=jnp.float32)
            o_ref[pl.ds(o0, h_out), :] = ok.astype(o_ref.dtype)
            return carry

        lax.fori_loop(0, blk, body, 0)
    return kernel


def _resize(x, wh, wwt):
    B, C, H, W = x.shape
    h_out = wh.shape[0]
    w_out = wwt.shape[1]
    BC = B * C
    itemsize = jnp.dtype(x.dtype).itemsize
    blk = _pick_bc_block(BC, H, W, h_out, w_out, itemsize)
    x2d = x.reshape(BC * H, W)                       # free reshape (contiguous dims)
    kernel = _make_resize_kernel(blk, H, h_out)
    out2d = pl.pallas_call(
        kernel,
        out_shape=jax.ShapeDtypeStruct((BC * h_out, w_out), x.dtype),
        grid=(BC // blk,),
        in_specs=[
            pl.BlockSpec((h_out, H), lambda i: (0, 0)),      # wh : resident across grid
            pl.BlockSpec((W, w_out), lambda i: (0, 0)),      # wwT: resident across grid
            pl.BlockSpec((blk * H, W), lambda i: (i, 0)),    # blk images per step
        ],
        out_specs=pl.BlockSpec((blk * h_out, w_out), lambda i: (i, 0)),
        scratch_shapes=[pltpu.VMEM((blk * H, w_out), wh.dtype)],
        compiler_params=pltpu.CompilerParams(
            dimension_semantics=("parallel",),               # megacore-shardable on v7x
            vmem_limit_bytes=_VMEM_LIMIT),
    )(wh, wwt, x2d)
    return out2d.reshape(B, C, h_out, w_out)


# ---------------------------------------------------------------------------
# Optional 1x1 Conv2d channel remap: one MXU matmul over a lane-dense (C, h*w) slab.
# ---------------------------------------------------------------------------
def _channel_map_kernel(w_ref, b_ref, x_ref, o_ref):
    # w_ref: [O, C] (VMEM), b_ref: [O, 1] f32, x_ref: [C, h*w], o_ref: [O, h*w]
    y = jnp.dot(w_ref[...], x_ref[...], preferred_element_type=jnp.float32)
    o_ref[...] = (y + b_ref[...]).astype(o_ref.dtype)


def _channel_map(x, weight, bias):
    B, C, h, w = x.shape
    weight = jnp.asarray(weight)
    O = weight.shape[0]
    N = h * w
    wdt = x.dtype if x.dtype in (jnp.bfloat16, jnp.float16) else jnp.float32
    w2 = weight.reshape(O, C).astype(wdt)
    if bias is None:
        b2 = jnp.zeros((O, 1), jnp.float32)
    else:
        b2 = jnp.asarray(bias).reshape(O, 1).astype(jnp.float32)
    x3 = x.reshape(B, C, N)                          # free reshape; lane-dense last dim
    out = pl.pallas_call(
        _channel_map_kernel,
        out_shape=jax.ShapeDtypeStruct((B, O, N), x.dtype),
        grid=(B,),
        in_specs=[
            pl.BlockSpec((O, C), lambda b: (0, 0)),
            pl.BlockSpec((O, 1), lambda b: (0, 0)),
            pl.BlockSpec((None, C, N), lambda b: (b, 0, 0)),
        ],
        out_specs=pl.BlockSpec((None, O, N), lambda b: (b, 0, 0)),
        compiler_params=pltpu.CompilerParams(
            dimension_semantics=("parallel",),
            vmem_limit_bytes=_VMEM_LIMIT),
    )(w2, b2, x3)
    return out.reshape(B, O, h, w)


# ---------------------------------------------------------------------------
# Module forward.
# ---------------------------------------------------------------------------
def spatial_rescaler_forward(x, *, n_stages=1, method='bilinear', multiplier=0.5,
                             channel_map_weight=None, channel_map_bias=None):
    """Pallas equivalent of SpatialRescaler.forward.

    x: [B, C, H, W]. Returns [B, C', floor(H*m^n), floor(W*m^n)] in x.dtype.
    channel_map_weight: optional [out_channels, C] (or [out_channels, C, 1, 1]) 1x1-conv weight.
    Jit-friendly: resampling matrices are built from static shapes at trace time.
    """
    assert n_stages >= 0
    B, C, H, W = x.shape
    wh_np, h_out = _compose_stage_weights(H, n_stages, multiplier, method)
    ww_np, w_out = _compose_stage_weights(W, n_stages, multiplier, method)

    if n_stages > 0 and (h_out != H or w_out != W):
        # bf16 inputs stay bf16 on the MXU (f32 accumulation); f32 inputs stay f32.
        wdt = x.dtype if x.dtype in (jnp.bfloat16, jnp.float16) else jnp.float32
        wh = jnp.asarray(wh_np, dtype=wdt)         # [h_out, H]
        wwt = jnp.asarray(ww_np.T, dtype=wdt)      # [W, w_out]
        x = _resize(x, wh, wwt)

    if channel_map_weight is not None:
        # NOTE: kept as a separate single-matmul kernel; could be fused into the resize
        # kernel (grid over B with whole-C blocks) to save one HBM round trip.
        x = _channel_map(x, channel_map_weight, channel_map_bias)
    return x


if __name__ == "__main__":
    key = jax.random.PRNGKey(0)
    k_x, k_w = jax.random.split(key)
    B, C, H, W = 2, 3, 32, 32
    # Snap inputs to the bf16 grid so the 2x2-average-pool equivalence checks are exact
    # regardless of the MXU's f32 pass mode.
    x = jax.random.normal(k_x, (B, C, H, W), dtype=jnp.float32)
    x = x.astype(jnp.bfloat16).astype(jnp.float32)

    fwd_default = jax.jit(spatial_rescaler_forward)                              # 1 stage, bilinear 0.5x
    fwd_2stage = jax.jit(lambda v: spatial_rescaler_forward(v, n_stages=2))
    fwd_remap = jax.jit(lambda v, w: spatial_rescaler_forward(v, channel_map_weight=w))

    # Stage 1: bilinear 0.5x (align_corners=False) == 2x2 average pooling.
    y = jax.block_until_ready(fwd_default(x))
    ref = x.reshape(B, C, H // 2, 2, W // 2, 2).mean(axis=(3, 5))
    assert y.shape == (B, C, H // 2, W // 2)
    assert jnp.allclose(y, ref, atol=1e-5, rtol=1e-5), "stage-1 mismatch"

    # Two composed stages == two successive 2x2 average pools (exercises weight composition).
    y2 = jax.block_until_ready(fwd_2stage(x))
    ref2 = ref.reshape(B, C, H // 4, 2, W // 4, 2).mean(axis=(3, 5))
    assert y2.shape == (B, C, H // 4, W // 4)
    assert jnp.allclose(y2, ref2, atol=1e-5, rtol=1e-5), "stage-2 mismatch"

    # Remap path: SpatialRescaler(in_channels=3, out_channels=4, bias=False).
    O = 4
    wmap = (0.1 * jax.random.normal(k_w, (O, C), dtype=jnp.float32))
    wmap = wmap.astype(jnp.bfloat16).astype(jnp.float32)
    y3 = jax.block_until_ready(fwd_remap(x, wmap))
    ref3 = jnp.einsum('oc,bchw->bohw', wmap, ref)
    assert y3.shape == (B, O, H // 2, W // 2)
    # looser tolerance: matmul pass-precision of kernel vs. reference einsum may differ
    assert jnp.allclose(y3, ref3, atol=3e-3, rtol=3e-3), "channel-map mismatch"

    # bf16 fast path (bf16 MXU operands, f32 accumulation).
    xb = x.astype(jnp.bfloat16)
    yb = jax.block_until_ready(fwd_default(xb))
    refb = xb.astype(jnp.float32).reshape(B, C, H // 2, 2, W // 2, 2).mean(axis=(3, 5))
    assert yb.dtype == jnp.bfloat16 and yb.shape == (B, C, H // 2, W // 2)
    assert jnp.allclose(yb.astype(jnp.float32), refb, atol=2e-2, rtol=2e-2), "bf16 mismatch"

    print("KERNEL_OK")
</pallas_src>

<mosaic_0001>
module attributes {stable_mosaic.version = 11 : i64} {
  func.func @kernel(%arg0: i32, %arg1: memref<16x32xf32, #tpu.memory_space<vmem>>, %arg2: memref<32x16xf32, #tpu.memory_space<vmem>>, %arg3: memref<192x32xf32, #tpu.memory_space<vmem>>, %arg4: memref<96x16xf32, #tpu.memory_space<vmem>>, %arg5: memref<192x16xf32, #tpu.memory_space<vmem>>) attributes {dimension_semantics = [#tpu.dimension_semantics<parallel>], iteration_bounds = array<i64: 1>, scalar_prefetch = 0 : i64, scratch_operands = 1 : i64, tpu.core_type = #tpu.core_type<tc>, window_params = [{pipeline_mode = #tpu.pipeline_mode<synchronous>, transform_indices = @transform_0, window_bounds = array<i64: 16, 32>}, {pipeline_mode = #tpu.pipeline_mode<synchronous>, transform_indices = @transform_1, window_bounds = array<i64: 32, 16>}, {transform_indices = @transform_2, window_bounds = array<i64: 192, 32>}, {transform_indices = @transform_3, window_bounds = array<i64: 96, 16>}]} {
    %c0 = arith.constant 0 : index
    %c0_0 = arith.constant 0 : index
    %0 = vector.load %arg3[%c0, %c0_0] : memref<192x32xf32, #tpu.memory_space<vmem>>, vector<192x32xf32>
    %c0_1 = arith.constant 0 : index
    %c0_2 = arith.constant 0 : index
    %1 = vector.load %arg2[%c0_1, %c0_2] : memref<32x16xf32, #tpu.memory_space<vmem>>, vector<32x16xf32>
    %cst = arith.constant dense<0.000000e+00> : vector<192x16xf32>
    %2 = tpu.matmul %0, %1, %cst {dimension_numbers = #tpu.dot_dimension_numbers<[1], [0], [0], [1], [0, 0, 1, 1], [], []>} : vector<192x32xf32>, vector<32x16xf32>, vector<192x16xf32> -> vector<192x16xf32>
    %c0_3 = arith.constant 0 : index
    %c0_4 = arith.constant 0 : index
    %3 = vector.load %arg5[%c0_3, %c0_4] : memref<192x16xf32, #tpu.memory_space<vmem>>, vector<192x16xf32>
    tpu.vector_store %arg5[%c0_3, %c0_4], %2 {strides = array<i32>} : memref<192x16xf32, #tpu.memory_space<vmem>>, vector<192x16xf32>,
    %c0_i32 = arith.constant 0 : i32
    %c6_i32 = arith.constant 6 : i32
    %4 = arith.addi %c0_i32, %c6_i32 : i32
    %c1_i32 = arith.constant 1 : i32
    scf.for %arg6 = %c0_i32 to %4 step %c1_i32  : i32 {
      %c32_i32 = arith.constant 32 : i32
      %5 = arith.muli %arg6, %c32_i32 : i32
      %6 = tpu.assume_multiple %5, 32 : i32
      %c16_i32 = arith.constant 16 : i32
      %7 = arith.muli %arg6, %c16_i32 : i32
      %8 = tpu.assume_multiple %7, 16 : i32
      %9 = arith.index_cast %6 : i32 to index
      %c0_6 = arith.constant 0 : index
      %10 = vector.load %arg5[%9, %c0_6] : memref<192x16xf32, #tpu.memory_space<vmem>>, vector<32x16xf32>
      %c0_7 = arith.constant 0 : index
      %c0_8 = arith.constant 0 : index
      %11 = vector.load %arg1[%c0_7, %c0_8] : memref<16x32xf32, #tpu.memory_space<vmem>>, vector<16x32xf32>
      %cst_9 = arith.constant dense<0.000000e+00> : vector<16x16xf32>
      %12 = tpu.matmul %11, %10, %cst_9 {dimension_numbers = #tpu.dot_dimension_numbers<[1], [0], [0], [1], [0, 0, 1, 1], [], []>} : vector<16x32xf32>, vector<32x16xf32>, vector<16x16xf32> -> vector<16x16xf32>
      %13 = arith.index_cast %8 : i32 to index
      %c0_10 = arith.constant 0 : index
      %14 = vector.load %arg4[%13, %c0_10] : memref<96x16xf32, #tpu.memory_space<vmem>>, vector<16x16xf32>
      tpu.vector_store %arg4[%13, %c0_10], %12 {strides = array<i32>} : memref<96x16xf32, #tpu.memory_space<vmem>>, vector<16x16xf32>,
    }
    %c6_i32_5 = arith.constant 6 : i32
    return
  }
  func.func @transform_0(%arg0: i32) -> (i32, i32) {
    %c0_i32 = arith.constant 0 : i32
    %c0_i32_0 = arith.constant 0 : i32
    %c0_i32_1 = arith.constant 0 : i32
    return %c0_i32, %c0_i32_0 : i32, i32
  }
  func.func @transform_1(%arg0: i32) -> (i32, i32) {
    %c0_i32 = arith.constant 0 : i32
    %c0_i32_0 = arith.constant 0 : i32
    %c0_i32_1 = arith.constant 0 : i32
    return %c0_i32, %c0_i32_0 : i32, i32
  }
  func.func @transform_2(%arg0: i32) -> (i32, i32) {
    %c0_i32 = arith.constant 0 : i32
    %c0_i32_0 = arith.constant 0 : i32
    return %arg0, %c0_i32 : i32, i32
  }
  func.func @transform_3(%arg0: i32) -> (i32, i32) {
    %c0_i32 = arith.constant 0 : i32
    %c0_i32_0 = arith.constant 0 : i32
    return %arg0, %c0_i32 : i32, i32
  }
}

</mosaic_0001>

<llo_original>
// kernel: spatial_rescaler_forward.1
$region0: #{spatial_rescaler_forward.1}
  #allocation0 [shape = 'u32[]', space=smem, size = 0x4, offset = 0x4, fixed_abs, tag = 'smem constant byte address 0x4 - core index']
  #allocation1 [shape = 'u32[144,128]{1,0:T(1,128)}', space=vmem, size = 0x12000, scoped, tag = 'internal scratch']
  #allocation2 [shape = 'f32[192,16]{1,0:T(8,128)}', space=vmem, size = 0x18000, scoped, tag = 'scratch operand']
  %s0 = inlined_call_operand.hbm [shape: f32[16,32], index: 0, kind: input, shape index: {}]
  %s1 = inlined_call_operand.hbm [shape: f32[32,16], index: 1, kind: input, shape index: {}]
  %s2 = inlined_call_operand.hbm [shape: f32[192,32], index: 2, kind: input, shape index: {}]
  %s3 = inlined_call_operand.hbm [shape: f32[96,16], index: 3, kind: output, shape index: {}]
  %s4 = sld [smem:[#allocation0]]
  $region41: #{spatial_rescaler_forward.1} parent=0
    _
  %s6 = ssub.s32 1, %s4
  %s7 = scalar_select 0, %s6, %s4
  $region1: #{spatial_rescaler_forward.1} parent=0
    #allocation3 [shape = 'u8[8192]{0}', space=vmem, size = 0x2000, scoped, tag = 'input window, operand 0, single buffered']
    #allocation4 [shape = 's32[1]{0}', space=sflag, size = 0x4, scoped, tag = 'scoped memory for spatial_rescaler_forward.1']
    #allocation5 [shape = 's32[1]{0}', space=sflag, size = 0x4, scoped, tag = 'scoped memory for spatial_rescaler_forward.1']
    #allocation6 [shape = 'u8[16384]{0}', space=vmem, size = 0x4000, scoped, tag = 'input window, operand 1, single buffered']
    #allocation7 [shape = 's32[1]{0}', space=sflag, size = 0x4, scoped, tag = 'scoped memory for spatial_rescaler_forward.1']
    #allocation8 [shape = 'u8[98304]{0}', space=vmem, size = 0x18000, scoped, tag = 'input window, operand 2, single buffered']
    #allocation9 [shape = 'u8[49152]{0}', space=vmem, size = 0xc000, scoped, tag = 'output window, operand 0, single buffered']
    %8 = vsyncpa [#allocation4], 0
    %9 = vsyncpa [#allocation7], 0
    %10 = vsyncpa [#allocation5], 0
    // Predicated region
    $region2: #{spatial_rescaler_forward.1} parent=1 // pred_check
      _
    $region3: #{spatial_rescaler_forward.1} parent=1 // pred_check_branch
      %12 = sbr.rel (0) target = $region5
    $region4: #{spatial_rescaler_forward.1} parent=1 // pred_region
      %s14 = ssub.s32 256, 256
      %15 = vsyncadd [#allocation4], %s14
      %s16 = sshll.u32 [#allocation3], 4
      %s17 = int_to_ptr.vmem [resolvable:$true] %s16
      %22 = dma.hbm_to_vmem [thread:$0]  %s0, 256, %s17, [#allocation4], 128, 128, 8
    $region5: #{spatial_rescaler_forward.1} parent=1 // pred_fallthru
      _
    // Predicated region
    $region6: #{spatial_rescaler_forward.1} parent=1 // pred_check
      _
    $region7: #{spatial_rescaler_forward.1} parent=1 // pred_check_branch
      %24 = sbr.rel (0) target = $region9
    $region8: #{spatial_rescaler_forward.1} parent=1 // pred_region
      %s26 = ssub.s32 512, 512
      %27 = vsyncadd [#allocation7], %s26
      %s28 = sshll.u32 [#allocation6], 4
      %s29 = int_to_ptr.vmem [resolvable:$true] %s28
      %34 = dma.hbm_to_vmem [thread:$0]  %s1, 512, %s29, [#allocation7], 128, 128, 8
    $region9: #{spatial_rescaler_forward.1} parent=1 // pred_fallthru
      _
    // Predicated region
    $region10: #{spatial_rescaler_forward.1} parent=1 // pred_check
      _
    $region11: #{spatial_rescaler_forward.1} parent=1 // pred_check_branch
      %36 = sbr.rel (0) target = $region13
    $region12: #{spatial_rescaler_forward.1} parent=1 // pred_region
      %s38 = ssub.s32 3072, 3072
      %39 = vsyncadd [#allocation7], %s38
      %s40 = sshll.u32 [#allocation8], 4
      %s41 = int_to_ptr.vmem [resolvable:$true] %s40
      %46 = dma.hbm_to_vmem [thread:$0]  %s2, 3072, %s41, [#allocation7], 128, 128, 8
    $region13: #{spatial_rescaler_forward.1} parent=1 // pred_fallthru
      _
    // Predicated region
    $region14: #{spatial_rescaler_forward.1} parent=1 // pred_check
      _
    $region15: #{spatial_rescaler_forward.1} parent=1 // pred_check_branch
      %48 = sbr.rel (0) target = $region17
    $region16: #{spatial_rescaler_forward.1} parent=1 // pred_region
      %49 = dma.done [#allocation4], 256
    $region17: #{spatial_rescaler_forward.1} parent=1 // pred_fallthru
      _
    // Predicated region
    $region18: #{spatial_rescaler_forward.1} parent=1 // pred_check
      _
    $region19: #{spatial_rescaler_forward.1} parent=1 // pred_check_branch
      %51 = sbr.rel (0) target = $region21
    $region20: #{spatial_rescaler_forward.1} parent=1 // pred_region
      %52 = dma.done [#allocation7], 512
    $region21: #{spatial_rescaler_forward.1} parent=1 // pred_fallthru
      _
    // Predicated region
    $region22: #{spatial_rescaler_forward.1} parent=1 // pred_check
      _
    $region23: #{spatial_rescaler_forward.1} parent=1 // pred_check_branch
      %54 = sbr.rel (0) target = $region25
    $region24: #{spatial_rescaler_forward.1} parent=1 // pred_region
      %55 = dma.done [#allocation7], 3072
    $region25: #{spatial_rescaler_forward.1} parent=1 // pred_fallthru
      _
    %v56 = vld [vmem:[#allocation8] sm:$0xff]
    %v57 = vld [vmem:[#allocation8 + $0x8] sm:$0xff]
    %v58 = vld [vmem:[#allocation8 + $0x10] sm:$0xff]
    %v59 = vld [vmem:[#allocation8 + $0x18] sm:$0xff]
    %v60 = vld [vmem:[#allocation8 + $0x20] sm:$0xff]
    %v61 = vld [vmem:[#allocation8 + $0x28] sm:$0xff]
    %v62 = vld [vmem:[#allocation8 + $0x30] sm:$0xff]
    %v63 = vld [vmem:[#allocation8 + $0x38] sm:$0xff]
    %v64 = vld [vmem:[#allocation8 + $0x40] sm:$0xff]
    %v65 = vld [vmem:[#allocation8 + $0x48] sm:$0xff]
    %v66 = vld [vmem:[#allocation8 + $0x50] sm:$0xff]
    %v67 = vld [vmem:[#allocation8 + $0x58] sm:$0xff]
    %v68 = vld [vmem:[#allocation8 + $0x60] sm:$0xff]
    %v69 = vld [vmem:[#allocation8 + $0x68] sm:$0xff]
    %v70 = vld [vmem:[#allocation8 + $0x70] sm:$0xff]
    %v71 = vld [vmem:[#allocation8 + $0x78] sm:$0xff]
    %v72 = vld [vmem:[#allocation8 + $0x80] sm:$0xff]
    %v73 = vld [vmem:[#allocation8 + $0x88] sm:$0xff]
    %v74 = vld [vmem:[#allocation8 + $0x90] sm:$0xff]
    %v75 = vld [vmem:[#allocation8 + $0x98] sm:$0xff]
    %v76 = vld [vmem:[#allocation8 + $0xa0] sm:$0xff]
    %v77 = vld [vmem:[#allocation8 + $0xa8] sm:$0xff]
    %v78 = vld [vmem:[#allocation8 + $0xb0] sm:$0xff]
    %v79 = vld [vmem:[#allocation8 + $0xb8] sm:$0xff]
    %v80 = vld [vmem:[#allocation6] sm:$0xff]
    %v81 = vld [vmem:[#allocation6 + $0x8] sm:$0xff]
    %v82 = vld [vmem:[#allocation6 + $0x10] sm:$0xff]
    %v83 = vld [vmem:[#allocation6 + $0x18] sm:$0xff]
    %vm84 = vcmask 261120
    %v86 = vsel %vm84, %v56, 0
    %v89 = vsel %vm84, %v57, 0
    %v92 = vsel %vm84, %v58, 0
    %v95 = vsel %vm84, %v59, 0
    %v98 = vsel %vm84, %v60, 0
    %v101 = vsel %vm84, %v61, 0
    %v104 = vsel %vm84, %v62, 0
    %v107 = vsel %vm84, %v63, 0
    %v110 = vsel %vm84, %v64, 0
    %v113 = vsel %vm84, %v65, 0
    %v116 = vsel %vm84, %v66, 0
    %v119 = vsel %vm84, %v67, 0
    %v122 = vsel %vm84, %v68, 0
    %v125 = vsel %vm84, %v69, 0
    %v128 = vsel %vm84, %v70, 0
    %v131 = vsel %vm84, %v71, 0
    %v134 = vsel %vm84, %v72, 0
    %v137 = vsel %vm84, %v73, 0
    %v140 = vsel %vm84, %v74, 0
    %v143 = vsel %vm84, %v75, 0
    %v146 = vsel %vm84, %v76, 0
    %v149 = vsel %vm84, %v77, 0
    %v152 = vsel %vm84, %v78, 0
    %v155 = vsel %vm84, %v79, 0
    %157 = vmatprep.subr.mxu0 0.0
    %158 = vmatpush1.msra.mxu0 %v80
    %159 = vmatprep.subr.mxu0 0.0
    %160 = vmatpush1.msra.mxu0 %v81
    %161 = vmatprep.subr.mxu0 0.0
    %162 = vmatpush1.msra.mxu0 %v82
    %163 = vmatprep.subr.mxu0 0.0
    %164 = vmatpush1.msra.mxu0 %v83
    %165 = vmatprep.subr.mxu0 0.0
    %166 = vmatpush1.msra.mxu0 0.0
    %167 = vmatprep.subr.mxu0 0.0
    %168 = vmatpush1.msra.mxu0 0.0
    %169 = vmatprep.subr.mxu0 0.0
    %170 = vmatpush1.msra.mxu0 0.0
    %171 = vmatprep.subr.mxu0 0.0
    %172 = vmatpush1.msra.mxu0 0.0
    %173 = vmatprep.subr.mxu0 0.0
    %174 = vmatpush1.msra.mxu0 0.0
    %175 = vmatprep.subr.mxu0 0.0
    %176 = vmatpush1.msra.mxu0 0.0
    %177 = vmatprep.subr.mxu0 0.0
    %178 = vmatpush1.msra.mxu0 0.0
    %179 = vmatprep.subr.mxu0 0.0
    %180 = vmatpush1.msra.mxu0 0.0
    %181 = vmatprep.subr.mxu0 0.0
    %182 = vmatpush1.msra.mxu0 0.0
    %183 = vmatprep.subr.mxu0 0.0
    %184 = vmatpush1.msra.mxu0 0.0
    %185 = vmatprep.subr.mxu0 0.0
    %186 = vmatpush1.msra.mxu0 0.0
    %187 = vmatprep.subr.mxu0 0.0
    %188 = vmatpush1.msra.mxu0 0.0
    %189 = vmatprep.subr.mxu0 0.0
    %190 = vmatpush1.msra.mxu0 0.0
    %191 = vmatprep.subr.mxu0 0.0
    %192 = vmatpush1.msra.mxu0 0.0
    %193 = vmatprep.subr.mxu0 0.0
    %194 = vmatpush1.msra.mxu0 0.0
    %195 = vmatprep.subr.mxu0 0.0
    %196 = vmatpush1.msra.mxu0 0.0
    %197 = vmatprep.subr.mxu0 0.0
    %198 = vmatpush1.msra.mxu0 0.0
    %199 = vmatprep.subr.mxu0 0.0
    %200 = vmatpush1.msra.mxu0 0.0
    %201 = vmatprep.subr.mxu0 0.0
    %202 = vmatpush1.msra.mxu0 0.0
    %203 = vmatprep.subr.mxu0 0.0
    %204 = vmatpush1.msra.mxu0 0.0
    %205 = vmatprep.subr.mxu0 0.0
    %206 = vmatpush1.msra.mxu0 0.0
    %207 = vmatprep.subr.mxu0 0.0
    %208 = vmatpush1.msra.mxu0 0.0
    %209 = vmatprep.subr.mxu0 0.0
    %210 = vmatpush1.msra.mxu0 0.0
    %211 = vmatprep.subr.mxu0 0.0
    %212 = vmatpush1.msra.mxu0 0.0
    %213 = vmatprep.subr.mxu0 0.0
    %214 = vmatpush1.msra.mxu0 0.0
    %215 = vmatprep.subr.mxu0 0.0
    %216 = vmatpush1.msra.mxu0 0.0
    %217 = vmatprep.subr.mxu0 0.0
    %218 = vmatpush1.msra.mxu0 0.0
    %219 = vmatprep.subr.mxu0 0.0
    %220 = vmatpush1.msra.mxu0 0.0
    %221 = vmatprep.mubr.f32.mxu0 0.0
    %222 = vmatmul.mubr.f32.gmra.mrb[0].mxu0 %v86
    %v223 = vpop.f32.mrb[0].mxu0
    %v224 = vadd.f32 0.0, %v223
    %v225 = vpop.f32.mrb[0].mxu0
    %226 = vmatprep.mubr.f32.mxu0 0.0
    %227 = vmatmul.mubr.f32.gmra.mrb[0].mxu0 %v89
    %v228 = vpop.f32.mrb[0].mxu0
    %v229 = vadd.f32 0.0, %v228
    %v230 = vpop.f32.mrb[0].mxu0
    %231 = vmatprep.mubr.f32.mxu0 0.0
    %232 = vmatmul.mubr.f32.gmra.mrb[0].mxu0 %v92
    %v233 = vpop.f32.mrb[0].mxu0
    %v234 = vadd.f32 0.0, %v233
    %v235 = vpop.f32.mrb[0].mxu0
    %236 = vmatprep.mubr.f32.mxu0 0.0
    %237 = vmatmul.mubr.f32.gmra.mrb[0].mxu0 %v95
    %v238 = vpop.f32.mrb[0].mxu0
    %v239 = vadd.f32 0.0, %v238
    %v240 = vpop.f32.mrb[0].mxu0
    %241 = vmatprep.mubr.f32.mxu0 0.0
    %242 = vmatmul.mubr.f32.gmra.mrb[0].mxu0 %v98
    %v243 = vpop.f32.mrb[0].mxu0
    %v244 = vadd.f32 0.0, %v243
    %v245 = vpop.f32.mrb[0].mxu0
    %246 = vmatprep.mubr.f32.mxu0 0.0
    %247 = vmatmul.mubr.f32.gmra.mrb[0].mxu0 %v101
    %v248 = vpop.f32.mrb[0].mxu0
    %v249 = vadd.f32 0.0, %v248
    %v250 = vpop.f32.mrb[0].mxu0
    %251 = vmatprep.mubr.f32.mxu0 0.0
    %252 = vmatmul.mubr.f32.gmra.mrb[0].mxu0 %v104
    %v253 = vpop.f32.mrb[0].mxu0
    %v254 = vadd.f32 0.0, %v253
    %v255 = vpop.f32.mrb[0].mxu0
    %256 = vmatprep.mubr.f32.mxu0 0.0
    %257 = vmatmul.mubr.f32.gmra.mrb[0].mxu0 %v107
    %v258 = vpop.f32.mrb[0].mxu0
    %v259 = vadd.f32 0.0, %v258
    %v260 = vpop.f32.mrb[0].mxu0
    %261 = vmatprep.mubr.f32.mxu0 0.0
    %262 = vmatmul.mubr.f32.gmra.mrb[0].mxu0 %v110
    %v263 = vpop.f32.mrb[0].mxu0
    %v264 = vadd.f32 0.0, %v263
    %v265 = vpop.f32.mrb[0].mxu0
    %266 = vmatprep.mubr.f32.mxu0 0.0
    %267 = vmatmul.mubr.f32.gmra.mrb[0].mxu0 %v113
    %v268 = vpop.f32.mrb[0].mxu0
    %v269 = vadd.f32 0.0, %v268
    %v270 = vpop.f32.mrb[0].mxu0
    %271 = vmatprep.mubr.f32.mxu0 0.0
    %272 = vmatmul.mubr.f32.gmra.mrb[0].mxu0 %v116
    %v273 = vpop.f32.mrb[0].mxu0
    %v274 = vadd.f32 0.0, %v273
    %v275 = vpop.f32.mrb[0].mxu0
    %276 = vmatprep.mubr.f32.mxu0 0.0
    %277 = vmatmul.mubr.f32.gmra.mrb[0].mxu0 %v119
    %v278 = vpop.f32.mrb[0].mxu0
    %v279 = vadd.f32 0.0, %v278
    %v280 = vpop.f32.mrb[0].mxu0
    %281 = vmatprep.mubr.f32.mxu0 0.0
    %282 = vmatmul.mubr.f32.gmra.mrb[0].mxu0 %v122
    %v283 = vpop.f32.mrb[0].mxu0
    %v284 = vadd.f32 0.0, %v283
    %v285 = vpop.f32.mrb[0].mxu0
    %286 = vmatprep.mubr.f32.mxu0 0.0
    %287 = vmatmul.mubr.f32.gmra.mrb[0].mxu0 %v125
    %v288 = vpop.f32.mrb[0].mxu0
    %v289 = vadd.f32 0.0, %v288
    %v290 = vpop.f32.mrb[0].mxu0
    %291 = vmatprep.mubr.f32.mxu0 0.0
    %292 = vmatmul.mubr.f32.gmra.mrb[0].mxu0 %v128
    %v293 = vpop.f32.mrb[0].mxu0
    %v294 = vadd.f32 0.0, %v293
    %v295 = vpop.f32.mrb[0].mxu0
    %296 = vmatprep.mubr.f32.mxu0 0.0
    %297 = vmatmul.mubr.f32.gmra.mrb[0].mxu0 %v131
    %v298 = vpop.f32.mrb[0].mxu0
    %v299 = vadd.f32 0.0, %v298
    %v300 = vpop.f32.mrb[0].mxu0
    %301 = vmatprep.mubr.f32.mxu0 0.0
    %302 = vmatmul.mubr.f32.gmra.mrb[0].mxu0 %v134
    %v303 = vpop.f32.mrb[0].mxu0
    %v304 = vadd.f32 0.0, %v303
    %v305 = vpop.f32.mrb[0].mxu0
    %306 = vmatprep.mubr.f32.mxu0 0.0
    %307 = vmatmul.mubr.f32.gmra.mrb[0].mxu0 %v137
    %v308 = vpop.f32.mrb[0].mxu0
    %v309 = vadd.f32 0.0, %v308
    %v310 = vpop.f32.mrb[0].mxu0
    %311 = vmatprep.mubr.f32.mxu0 0.0
    %312 = vmatmul.mubr.f32.gmra.mrb[0].mxu0 %v140
    %v313 = vpop.f32.mrb[0].mxu0
    %v314 = vadd.f32 0.0, %v313
    %v315 = vpop.f32.mrb[0].mxu0
    %316 = vmatprep.mubr.f32.mxu0 0.0
    %317 = vmatmul.mubr.f32.gmra.mrb[0].mxu0 %v143
    %v318 = vpop.f32.mrb[0].mxu0
    %v319 = vadd.f32 0.0, %v318
    %v320 = vpop.f32.mrb[0].mxu0
    %321 = vmatprep.mubr.f32.mxu0 0.0
    %322 = vmatmul.mubr.f32.gmra.mrb[0].mxu0 %v146
    %v323 = vpop.f32.mrb[0].mxu0
    %v324 = vadd.f32 0.0, %v323
    %v325 = vpop.f32.mrb[0].mxu0
    %326 = vmatprep.mubr.f32.mxu0 0.0
    %327 = vmatmul.mubr.f32.gmra.mrb[0].mxu0 %v149
    %v328 = vpop.f32.mrb[0].mxu0
    %v329 = vadd.f32 0.0, %v328
    %v330 = vpop.f32.mrb[0].mxu0
    %331 = vmatprep.mubr.f32.mxu0 0.0
    %332 = vmatmul.mubr.f32.gmra.mrb[0].mxu0 %v152
    %v333 = vpop.f32.mrb[0].mxu0
    %v334 = vadd.f32 0.0, %v333
    %v335 = vpop.f32.mrb[0].mxu0
    %336 = vmatprep.mubr.f32.mxu0 0.0
    %337 = vmatmul.mubr.f32.gmra.mrb[0].mxu0 %v155
    %v338 = vpop.f32.mrb[0].mxu0
    %v339 = vadd.f32 0.0, %v338
    %v340 = vpop.f32.mrb[0].mxu0
    %341 = vdwg.mxu0
    %vm342 = vcmask 130048
    %343 = vst.msk [vmem:[#allocation2] sm:$0xff] %vm342, %v224
    %344 = vst.msk [vmem:[#allocation2 + $0x8] sm:$0xff] %vm342, %v229
    %345 = vst.msk [vmem:[#allocation2 + $0x10] sm:$0xff] %vm342, %v234
    %346 = vst.msk [vmem:[#allocation2 + $0x18] sm:$0xff] %vm342, %v239
    %347 = vst.msk [vmem:[#allocation2 + $0x20] sm:$0xff] %vm342, %v244
    %348 = vst.msk [vmem:[#allocation2 + $0x28] sm:$0xff] %vm342, %v249
    %349 = vst.msk [vmem:[#allocation2 + $0x30] sm:$0xff] %vm342, %v254
    %350 = vst.msk [vmem:[#allocation2 + $0x38] sm:$0xff] %vm342, %v259
    %351 = vst.msk [vmem:[#allocation2 + $0x40] sm:$0xff] %vm342, %v264
    %352 = vst.msk [vmem:[#allocation2 + $0x48] sm:$0xff] %vm342, %v269
    %353 = vst.msk [vmem:[#allocation2 + $0x50] sm:$0xff] %vm342, %v274
    %354 = vst.msk [vmem:[#allocation2 + $0x58] sm:$0xff] %vm342, %v279
    %355 = vst.msk [vmem:[#allocation2 + $0x60] sm:$0xff] %vm342, %v284
    %356 = vst.msk [vmem:[#allocation2 + $0x68] sm:$0xff] %vm342, %v289
    %357 = vst.msk [vmem:[#allocation2 + $0x70] sm:$0xff] %vm342, %v294
    %358 = vst.msk [vmem:[#allocation2 + $0x78] sm:$0xff] %vm342, %v299
    %359 = vst.msk [vmem:[#allocation2 + $0x80] sm:$0xff] %vm342, %v304
    %360 = vst.msk [vmem:[#allocation2 + $0x88] sm:$0xff] %vm342, %v309
    %361 = vst.msk [vmem:[#allocation2 + $0x90] sm:$0xff] %vm342, %v314
    %362 = vst.msk [vmem:[#allocation2 + $0x98] sm:$0xff] %vm342, %v319
    %363 = vst.msk [vmem:[#allocation2 + $0xa0] sm:$0xff] %vm342, %v324
    %364 = vst.msk [vmem:[#allocation2 + $0xa8] sm:$0xff] %vm342, %v329
    %365 = vst.msk [vmem:[#allocation2 + $0xb0] sm:$0xff] %vm342, %v334
    %366 = vst.msk [vmem:[#allocation2 + $0xb8] sm:$0xff] %vm342, %v339
    loop: start=0, step=1, limit=6
    $region26: #{spatial_rescaler_forward.1} parent=1 // loop_pre_header
      _
    $region27: #{spatial_rescaler_forward.1} parent=1 // loop_header
      %s368 = sphi 0, %s372
      %p369 = scmp.ge.s32.totalorder %s368, 6
    $region28: #{spatial_rescaler_forward.1} parent=1 // loop_header_branch
      %371 = sbr.rel (%p369) target = $region32
    $region29: #{spatial_rescaler_forward.1} parent=1 // loop_body
      %s373 = smul.u32 %s368, 32
      %s374 = smul.u32 %s368, 16
      %s375 = scalar_lea.vmem [#allocation2], %s373
      %v376 = vld [vmem:[%s375] sm:$0xff]
      %v377 = vld [vmem:[%s375 + $0x8] sm:$0xff]
      %v378 = vld [vmem:[%s375 + $0x10] sm:$0xff]
      %v379 = vld [vmem:[%s375 + $0x18] sm:$0xff]
      %v380 = vld [vmem:[#allocation3] sm:$0xff]
      %v381 = vld [vmem:[#allocation3 + $0x8] sm:$0xff]
      %v383 = vsel %vm84, %v380, 0
      %v386 = vsel %vm84, %v381, 0
      %388 = vmatprep.subr.mxu0 0.0
      %389 = vmatpush1.msra.mxu0 %v376
      %390 = vmatprep.subr.mxu0 0.0
      %391 = vmatpush1.msra.mxu0 %v377
      %392 = vmatprep.subr.mxu0 0.0
      %393 = vmatpush1.msra.mxu0 %v378
      %394 = vmatprep.subr.mxu0 0.0
      %395 = vmatpush1.msra.mxu0 %v379
      %396 = vmatprep.subr.mxu0 0.0
      %397 = vmatpush1.msra.mxu0 0.0
      %398 = vmatprep.subr.mxu0 0.0
      %399 = vmatpush1.msra.mxu0 0.0
      %400 = vmatprep.subr.mxu0 0.0
      %401 = vmatpush1.msra.mxu0 0.0
      %402 = vmatprep.subr.mxu0 0.0
      %403 = vmatpush1.msra.mxu0 0.0
      %404 = vmatprep.subr.mxu0 0.0
      %405 = vmatpush1.msra.mxu0 0.0
      %406 = vmatprep.subr.mxu0 0.0
      %407 = vmatpush1.msra.mxu0 0.0
      %408 = vmatprep.subr.mxu0 0.0
      %409 = vmatpush1.msra.mxu0 0.0
      %410 = vmatprep.subr.mxu0 0.0
      %411 = vmatpush1.msra.mxu0 0.0
      %412 = vmatprep.subr.mxu0 0.0
      %413 = vmatpush1.msra.mxu0 0.0
      %414 = vmatprep.subr.mxu0 0.0
      %415 = vmatpush1.msra.mxu0 0.0
      %416 = vmatprep.subr.mxu0 0.0
      %417 = vmatpush1.msra.mxu0 0.0
      %418 = vmatprep.subr.mxu0 0.0
      %419 = vmatpush1.msra.mxu0 0.0
      %420 = vmatprep.subr.mxu0 0.0
      %421 = vmatpush1.msra.mxu0 0.0
      %422 = vmatprep.subr.mxu0 0.0
      %423 = vmatpush1.msra.mxu0 0.0
      %424 = vmatprep.subr.mxu0 0.0
      %425 = vmatpush1.msra.mxu0 0.0
      %426 = vmatprep.subr.mxu0 0.0
      %427 = vmatpush1.msra.mxu0 0.0
      %428 = vmatprep.subr.mxu0 0.0
      %429 = vmatpush1.msra.mxu0 0.0
      %430 = vmatprep.subr.mxu0 0.0
      %431 = vmatpush1.msra.mxu0 0.0
      %432 = vmatprep.subr.mxu0 0.0
      %433 = vmatpush1.msra.mxu0 0.0
      %434 = vmatprep.subr.mxu0 0.0
      %435 = vmatpush1.msra.mxu0 0.0
      %436 = vmatprep.subr.mxu0 0.0
      %437 = vmatpush1.msra.mxu0 0.0
      %438 = vmatprep.subr.mxu0 0.0
      %439 = vmatpush1.msra.mxu0 0.0
      %440 = vmatprep.subr.mxu0 0.0
      %441 = vmatpush1.msra.mxu0 0.0
      %442 = vmatprep.subr.mxu0 0.0
      %443 = vmatpush1.msra.mxu0 0.0
      %444 = vmatprep.subr.mxu0 0.0
      %445 = vmatpush1.msra.mxu0 0.0
      %446 = vmatprep.subr.mxu0 0.0
      %447 = vmatpush1.msra.mxu0 0.0
      %448 = vmatprep.subr.mxu0 0.0
      %449 = vmatpush1.msra.mxu0 0.0
      %450 = vmatprep.subr.mxu0 0.0
      %451 = vmatpush1.msra.mxu0 0.0
      %452 = vmatprep.mubr.f32.mxu0 0.0
      %453 = vmatmul.mubr.f32.gmra.mrb[0].mxu0 %v383
      %v454 = vpop.f32.mrb[0].mxu0
      %v455 = vadd.f32 0.0, %v454
      %v456 = vpop.f32.mrb[0].mxu0
      %457 = vmatprep.mubr.f32.mxu0 0.0
      %458 = vmatmul.mubr.f32.gmra.mrb[0].mxu0 %v386
      %v459 = vpop.f32.mrb[0].mxu0
      %v460 = vadd.f32 0.0, %v459
      %v461 = vpop.f32.mrb[0].mxu0
      %462 = vdwg.mxu0
      %s463 = scalar_lea.vmem [#allocation9], %s374
      %464 = vst.msk [vmem:[%s463] sm:$0xff] %vm342, %v455
      %465 = vst.msk [vmem:[%s463 + $0x8] sm:$0xff] %vm342, %v460
    $region30: #{spatial_rescaler_forward.1} parent=1 // loop_footer
      %s372 = sadd.s32 1, %s368
    $region31: #{spatial_rescaler_forward.1} parent=1 // loop_footer_branch
      %367 = sbr.rel target = $region27
    $region32: #{spatial_rescaler_forward.1} parent=1 // loop_exit
      _
    // Predicated region
    $region33: #{spatial_rescaler_forward.1} parent=1 // pred_check
      _
    $region34: #{spatial_rescaler_forward.1} parent=1 // pred_check_branch
      %467 = sbr.rel (0) target = $region36
    $region35: #{spatial_rescaler_forward.1} parent=1 // pred_region
      %s469 = ssub.s32 1536, 1536
      %470 = vsyncadd [#allocation5], %s469
      %s471 = sshll.u32 [#allocation9], 4
      %s472 = int_to_ptr.vmem [resolvable:$true] %s471
      %477 = dma.vmem_to_hbm [thread:$0]  %s472, 1536, %s3, [#allocation5], 128, 128, 8
    $region36: #{spatial_rescaler_forward.1} parent=1 // pred_fallthru
      _
    // Predicated region
    $region37: #{spatial_rescaler_forward.1} parent=1 // pred_check
      _
    $region38: #{spatial_rescaler_forward.1} parent=1 // pred_check_branch
      %479 = sbr.rel (0) target = $region40
    $region39: #{spatial_rescaler_forward.1} parent=1 // pred_region
      %480 = dma.done [#allocation5], 1536
    $region40: #{spatial_rescaler_forward.1} parent=1 // pred_fallthru
      _
    %481 = vsyncpa [#allocation4], 1
    %482 = vsyncpa [#allocation7], 1
    %483 = vsyncpa [#allocation5], 1

</llo_original>
